<compile_context>
chip_gen: v6e
topology: v6e:2x2x1
jax: 0.10.0
libtpu: 0.0.40
codegen_flags: <defaults>
</compile_context>

<pallas_src>
import functools
import math

import jax
import jax.numpy as jnp
from jax.experimental import pallas as pl
from jax.experimental.pallas import tpu as pltpu

_LANE = 128


def _wsi_loss_kernel(sup_ref, uns_ref, out_ref, *, S, U, neg_log_thr, alph):
    # sup_ref: (2, s_rows, 128) f32 VMEM  -> [sup_logits ; y_truth], zero padded
    # uns_ref: (2, u_rows, 128) f32 VMEM  -> [unsup_ori  ; unsup_aug], zero padded
    # out_ref: (3,) f32 SMEM              -> [loss, loss_1, alph*loss_2]
    x = sup_ref[0]          # sup logits   (s_rows, 128)
    y = sup_ref[1]          # labels       (s_rows, 128)

    # binary_cross_entropy_with_logits, reduction='none':
    #   max(x, 0) - x*y + log(1 + exp(-|x|))
    bce = jnp.maximum(x, 0.0) - x * y + jnp.log1p(jnp.exp(-jnp.abs(x)))

    s_rows = x.shape[0]
    if S == s_rows * _LANE:
        valid = None                                   # no padding -> no mask
    else:
        row = jax.lax.broadcasted_iota(jnp.int32, (s_rows, _LANE), 0)
        lane = jax.lax.broadcasted_iota(jnp.int32, (s_rows, _LANE), 1)
        valid = (row * _LANE + lane) < S

    # TSA mask: keep = NOT(exp(-bce) > thr)  <=>  bce >= -log(thr)
    keep = bce >= neg_log_thr
    if valid is not None:
        keep = jnp.logical_and(keep, valid)
    mask_f = keep.astype(jnp.float32)

    mask_sum = jnp.sum(mask_f)
    masked_sum = jnp.sum(bce * mask_f)
    bce_for_max = bce if valid is None else jnp.where(valid, bce, -jnp.inf)
    max_bce = jnp.max(bce_for_max)

    safe_denom = jnp.where(mask_sum == 0.0, 1.0, mask_sum)
    loss_1 = jnp.where(mask_sum == 0.0, max_bce, masked_sum / safe_denom)

    # Unsup consistency MSE on sigmoids (linked branch unused in the reference).
    # Zero padding contributes sigmoid(0)-sigmoid(0)=0 to the sum -> no mask;
    # divide by the true count U.
    sig = jax.nn.sigmoid(uns_ref[...])                 # (2, u_rows, 128)
    d = sig[0] - sig[1]
    loss_2 = jnp.sum(d * d) * (1.0 / float(U))

    weighted = alph * loss_2
    out_ref[0] = loss_1 + weighted
    out_ref[1] = loss_1
    out_ref[2] = weighted


def _pad_to(v, n):
    return jnp.pad(v, (0, n - v.shape[0]))


def wsi_loss(y_pred, y_truth, sup_batch_size, unsup_batch_size, tsa_threshold,
             alph, gamma=None, beta=None):
    """JAX/Pallas equivalent of wsiLoss.forward. Returns (loss, loss_1, alph*loss_2)."""
    del gamma, beta  # unused in the reference forward
    S, U = int(sup_batch_size), int(unsup_batch_size)

    yp = y_pred.reshape(-1).astype(jnp.float32)
    yt = y_truth.reshape(-1).astype(jnp.float32)

    s_rows = max(1, -(-S // _LANE))
    u_rows = max(1, -(-U // _LANE))
    s_pad, u_pad = s_rows * _LANE, u_rows * _LANE

    sup = _pad_to(yp[:S], s_pad)
    tru = _pad_to(yt[:S], s_pad)
    ori = _pad_to(yp[S:S + U], u_pad)
    # linked branch yp[S+U : S+2U] only gets an (unused) sigmoid in the ref -> skipped
    aug = _pad_to(yp[S + 2 * U:S + 3 * U], u_pad)

    sup_stack = jnp.stack([sup, tru]).reshape(2, s_rows, _LANE)
    uns_stack = jnp.stack([ori, aug]).reshape(2, u_rows, _LANE)

    # tsa_threshold is a Python float: bake -log(thr) as a constant, no SMEM input.
    thr = float(tsa_threshold)
    neg_log_thr = -math.log(thr) if thr > 0.0 else float("inf")

    kernel = functools.partial(
        _wsi_loss_kernel, S=S, U=U, neg_log_thr=neg_log_thr, alph=float(alph))

    out = pl.pallas_call(
        kernel,
        out_shape=jax.ShapeDtypeStruct((3,), jnp.float32),
        in_specs=[
            pl.BlockSpec(memory_space=pltpu.MemorySpace.VMEM),  # [sup ; y_truth]
            pl.BlockSpec(memory_space=pltpu.MemorySpace.VMEM),  # [ori ; aug]
        ],
        out_specs=pl.BlockSpec(memory_space=pltpu.MemorySpace.SMEM),
    )(sup_stack, uns_stack)

    return out[0], out[1], out[2]


def _reference(y_pred, y_truth, S, U, thr, alph):
    """Pure-JAX reference mirroring the PyTorch code, for a sanity check."""
    yp = y_pred.reshape(-1).astype(jnp.float32)
    x = yp[:S]
    y = y_truth.reshape(-1).astype(jnp.float32)
    sup_loss = jnp.maximum(x, 0.0) - x * y + jnp.log1p(jnp.exp(-jnp.abs(x)))
    larger = jnp.exp(-sup_loss) > thr
    mask = 1.0 - larger.astype(jnp.float32)
    ms = jnp.sum(mask)
    loss_1 = jnp.where(ms == 0.0, jnp.max(sup_loss),
                       jnp.sum(sup_loss * mask) / jnp.where(ms == 0.0, 1.0, ms))
    so = jax.nn.sigmoid(yp[S:S + U])
    sa = jax.nn.sigmoid(yp[S + 2 * U:S + 3 * U])
    loss_2 = jnp.mean((so - sa) ** 2)
    return loss_1 + alph * loss_2, loss_1, alph * loss_2


if __name__ == "__main__":
    # Deterministic hyper-params (the module holds no learnable weights).
    alph, gamma, beta = 0.5, 2.0, 1.0
    tsa_threshold = 0.7

    sup_batch_size = 8
    unsup_batch_size = 8
    total = sup_batch_size + 3 * unsup_batch_size  # labeled | ori | linked | aug

    key = jax.random.PRNGKey(0)
    k1, k2 = jax.random.split(key)
    y_pred = jax.random.normal(k1, (total, 1), dtype=jnp.float32)  # model logits
    y_truth = jax.random.bernoulli(k2, 0.5, (sup_batch_size,)).astype(jnp.float32)

    loss, loss_1, loss_2w = wsi_loss(
        y_pred, y_truth, sup_batch_size, unsup_batch_size, tsa_threshold,
        alph, gamma, beta)
    jax.block_until_ready((loss, loss_1, loss_2w))

    # sanity check against pure-JAX reference
    ref_loss, ref_l1, ref_l2w = _reference(
        y_pred, y_truth, sup_batch_size, unsup_batch_size, tsa_threshold, alph)
    assert jnp.allclose(loss, ref_loss, atol=1e-5), (loss, ref_loss)
    assert jnp.allclose(loss_1, ref_l1, atol=1e-5), (loss_1, ref_l1)
    assert jnp.allclose(loss_2w, ref_l2w, atol=1e-5), (loss_2w, ref_l2w)

    print("KERNEL_OK")
</pallas_src>

<mosaic_0001>
module attributes {stable_mosaic.version = 11 : i64} {
  func.func @_wsi_loss_kernel(%arg0: memref<2x1x128xf32, #tpu.memory_space<vmem>>, %arg1: memref<2x1x128xf32, #tpu.memory_space<vmem>>, %arg2: memref<3xf32, #tpu.memory_space<smem>>) attributes {dimension_semantics = [], scalar_prefetch = 0 : i64, scratch_operands = 0 : i64, tpu.core_type = #tpu.core_type<tc>} {
    %c0 = arith.constant 0 : index
    %c0_0 = arith.constant 0 : index
    %c0_1 = arith.constant 0 : index
    %0 = vector.load %arg0[%c0, %c0_0, %c0_1] : memref<2x1x128xf32, #tpu.memory_space<vmem>>, vector<1x1x128xf32>
    %1 = vector.shape_cast %0 : vector<1x1x128xf32> to vector<1x128xf32>
    %c1 = arith.constant 1 : index
    %c0_2 = arith.constant 0 : index
    %c0_3 = arith.constant 0 : index
    %2 = vector.load %arg0[%c1, %c0_2, %c0_3] : memref<2x1x128xf32, #tpu.memory_space<vmem>>, vector<1x1x128xf32>
    %3 = vector.shape_cast %2 : vector<1x1x128xf32> to vector<1x128xf32>
    %cst = arith.constant 0.000000e+00 : f32
    %4 = vector.broadcast %cst : f32 to vector<1x128xf32>
    %5 = arith.maximumf %1, %4 : vector<1x128xf32>
    %6 = arith.mulf %1, %3 : vector<1x128xf32>
    %7 = arith.subf %5, %6 : vector<1x128xf32>
    %8 = math.absf %1 : vector<1x128xf32>
    %cst_4 = arith.constant 0.000000e+00 : f32
    %9 = vector.broadcast %cst_4 : f32 to vector<1x128xf32>
    %10 = arith.subf %9, %8 : vector<1x128xf32>
    %11 = math.exp %10 : vector<1x128xf32>
    %12 = math.log1p %11 : vector<1x128xf32>
    %13 = arith.addf %7, %12 : vector<1x128xf32>
    %14 = tpu.iota {dimensions = array<i32: 0>} : vector<1x128xi32>
    %15 = tpu.iota {dimensions = array<i32: 1>} : vector<1x128xi32>
    %c128_i32 = arith.constant 128 : i32
    %16 = vector.broadcast %c128_i32 : i32 to vector<1x128xi32>
    %17 = arith.muli %14, %16 : vector<1x128xi32>
    %18 = arith.addi %17, %15 : vector<1x128xi32>
    %c8_i32 = arith.constant 8 : i32
    %19 = vector.broadcast %c8_i32 : i32 to vector<1x128xi32>
    %20 = arith.cmpi slt, %18, %19 : vector<1x128xi32>
    %cst_5 = arith.constant 0.356674939 : f32
    %21 = vector.broadcast %cst_5 : f32 to vector<1x128xf32>
    %22 = arith.cmpf oge, %13, %21 : vector<1x128xf32>
    %23 = arith.andi %22, %20 : vector<1x128xi1>
    %24 = arith.extui %23 : vector<1x128xi1> to vector<1x128xi32>
    %25 = arith.sitofp %24 : vector<1x128xi32> to vector<1x128xf32>
    %26 = vector.shape_cast %25 : vector<1x128xf32> to vector<1x1x128xf32>
    %cst_6 = arith.constant dense<0.000000e+00> : vector<1xf32>
    %27 = vector.multi_reduction <add>, %26, %cst_6 [1, 2] : vector<1x1x128xf32> to vector<1xf32>
    %28 = vector.shape_cast %27 : vector<1xf32> to vector<1x1x1xf32>
    %29 = vector.extract %28[0, 0, 0] : f32 from vector<1x1x1xf32>
    %30 = arith.mulf %13, %25 : vector<1x128xf32>
    %31 = vector.shape_cast %30 : vector<1x128xf32> to vector<1x1x128xf32>
    %cst_7 = arith.constant dense<0.000000e+00> : vector<1xf32>
    %32 = vector.multi_reduction <add>, %31, %cst_7 [1, 2] : vector<1x1x128xf32> to vector<1xf32>
    %33 = vector.shape_cast %32 : vector<1xf32> to vector<1x1x1xf32>
    %34 = vector.extract %33[0, 0, 0] : f32 from vector<1x1x1xf32>
    %cst_8 = arith.constant 0xFF800000 : f32
    %35 = vector.broadcast %cst_8 : f32 to vector<1x128xf32>
    %36 = arith.select %20, %13, %35 : vector<1x128xi1>, vector<1x128xf32>
    %37 = vector.shape_cast %36 : vector<1x128xf32> to vector<1x1x128xf32>
    %cst_9 = arith.constant dense<0xFF800000> : vector<1xf32>
    %38 = vector.multi_reduction <maximumf>, %37, %cst_9 [1, 2] : vector<1x1x128xf32> to vector<1xf32>
    %39 = vector.shape_cast %38 : vector<1xf32> to vector<1x1x1xf32>
    %40 = vector.extract %39[0, 0, 0] : f32 from vector<1x1x1xf32>
    %cst_10 = arith.constant 0.000000e+00 : f32
    %41 = arith.cmpf oeq, %29, %cst_10 : f32
    %cst_11 = arith.constant 1.000000e+00 : f32
    %42 = arith.select %41, %cst_11, %29 : f32
    %cst_12 = arith.constant 0.000000e+00 : f32
    %43 = arith.cmpf oeq, %29, %cst_12 : f32
    %44 = arith.divf %34, %42 : f32
    %45 = arith.select %43, %40, %44 : f32
    %c0_13 = arith.constant 0 : index
    %c0_14 = arith.constant 0 : index
    %c0_15 = arith.constant 0 : index
    %46 = vector.load %arg1[%c0_13, %c0_14, %c0_15] : memref<2x1x128xf32, #tpu.memory_space<vmem>>, vector<2x1x128xf32>
    %47 = arith.negf %46 : vector<2x1x128xf32>
    %48 = math.exp %47 : vector<2x1x128xf32>
    %cst_16 = arith.constant 1.000000e+00 : f32
    %49 = vector.broadcast %cst_16 : f32 to vector<2x1x128xf32>
    %50 = arith.addf %49, %48 : vector<2x1x128xf32>
    %51 = arith.divf %49, %50 : vector<2x1x128xf32>
    %52 = vector.extract_strided_slice %51 {offsets = [0, 0, 0], sizes = [1, 1, 128], strides = [1, 1, 1]} : vector<2x1x128xf32> to vector<1x1x128xf32>
    %53 = vector.shape_cast %52 : vector<1x1x128xf32> to vector<1x128xf32>
    %54 = vector.extract_strided_slice %51 {offsets = [1, 0, 0], sizes = [1, 1, 128], strides = [1, 1, 1]} : vector<2x1x128xf32> to vector<1x1x128xf32>
    %55 = vector.shape_cast %54 : vector<1x1x128xf32> to vector<1x128xf32>
    %56 = arith.subf %53, %55 : vector<1x128xf32>
    %57 = arith.mulf %56, %56 : vector<1x128xf32>
    %58 = vector.shape_cast %57 : vector<1x128xf32> to vector<1x1x128xf32>
    %cst_17 = arith.constant dense<0.000000e+00> : vector<1xf32>
    %59 = vector.multi_reduction <add>, %58, %cst_17 [1, 2] : vector<1x1x128xf32> to vector<1xf32>
    %60 = vector.shape_cast %59 : vector<1xf32> to vector<1x1x1xf32>
    %61 = vector.extract %60[0, 0, 0] : f32 from vector<1x1x1xf32>
    %cst_18 = arith.constant 1.250000e-01 : f32
    %62 = arith.mulf %61, %cst_18 : f32
    %cst_19 = arith.constant 5.000000e-01 : f32
    %63 = arith.mulf %cst_19, %62 : f32
    %64 = arith.addf %45, %63 : f32
    %c0_20 = arith.constant 0 : index
    %65 = memref.load %arg2[%c0_20] : memref<3xf32, #tpu.memory_space<smem>>
    memref.store %64, %arg2[%c0_20] : memref<3xf32, #tpu.memory_space<smem>>
    %c1_21 = arith.constant 1 : index
    %66 = memref.load %arg2[%c1_21] : memref<3xf32, #tpu.memory_space<smem>>
    memref.store %45, %arg2[%c1_21] : memref<3xf32, #tpu.memory_space<smem>>
    %c2 = arith.constant 2 : index
    %67 = memref.load %arg2[%c2] : memref<3xf32, #tpu.memory_space<smem>>
    memref.store %63, %arg2[%c2] : memref<3xf32, #tpu.memory_space<smem>>
    return
  }
}

</mosaic_0001>

<llo_original>
// kernel: tpu_custom_call.1
$region0: #{tpu_custom_call.1}
  #allocation0 [shape = 'u32[]', space=smem, size = 0x4, offset = 0x4, fixed_abs, tag = 'smem constant byte address 0x4 - core index']
  #allocation1 [shape = 'u32[144,128]{1,0:T(1,128)}', space=vmem, size = 0x12000, scoped, tag = 'internal scratch']
  %s0 = inlined_call_operand.hbm [shape: f32[2,1,128], index: 0, kind: input, shape index: {}]
  %s1 = inlined_call_operand.hbm [shape: f32[2,1,128], index: 1, kind: input, shape index: {}]
  %s2 = inlined_call_operand.hbm [shape: f32[3], index: 2, kind: output, shape index: {}]
  %s3 = sld [smem:[#allocation0]]
  $region26: #{tpu_custom_call.1} parent=0
    _
  %s5 = ssub.s32 1, %s3
  %s6 = scalar_select 0, %s5, %s3
  $region1: #{tpu_custom_call.1} parent=0
    #allocation2 [shape = 'u8[1024]{0}', space=vmem, size = 0x400, scoped, tag = 'input window, operand 0, single buffered']
    #allocation3 [shape = 's32[1]{0}', space=sflag, size = 0x4, scoped, tag = 'scoped memory for tpu_custom_call.1']
    #allocation4 [shape = 's32[1]{0}', space=sflag, size = 0x4, scoped, tag = 'scoped memory for tpu_custom_call.1']
    #allocation5 [shape = 'u8[1024]{0}', space=vmem, size = 0x400, scoped, tag = 'input window, operand 1, single buffered']
    #allocation6 [shape = 's32[1]{0}', space=sflag, size = 0x4, scoped, tag = 'scoped memory for tpu_custom_call.1']
    #allocation7 [shape = 'u8[512]{0}', space=smem, size = 0x200, scoped, tag = 'output window, operand 0, single buffered']
    %7 = vsyncpa [#allocation3], 0
    %8 = vsyncpa [#allocation6], 0
    %9 = vsyncpa [#allocation4], 0
    // Predicated region
    $region2: #{tpu_custom_call.1} parent=1 // pred_check
      _
    $region3: #{tpu_custom_call.1} parent=1 // pred_check_branch
      %11 = sbr.rel (0) target = $region5
    $region4: #{tpu_custom_call.1} parent=1 // pred_region
      %s13 = ssub.s32 32, 32
      %14 = vsyncadd [#allocation3], %s13
      %s15 = sshll.u32 [#allocation2], 4
      %s16 = int_to_ptr.vmem [resolvable:$true] %s15
      %21 = dma.hbm_to_vmem [thread:$0]  %s0, 32, %s16, [#allocation3], 16, 16, 1
    $region5: #{tpu_custom_call.1} parent=1 // pred_fallthru
      _
    // Predicated region
    $region6: #{tpu_custom_call.1} parent=1 // pred_check
      _
    $region7: #{tpu_custom_call.1} parent=1 // pred_check_branch
      %23 = sbr.rel (0) target = $region9
    $region8: #{tpu_custom_call.1} parent=1 // pred_region
      %s25 = ssub.s32 32, 32
      %26 = vsyncadd [#allocation6], %s25
      %s27 = sshll.u32 [#allocation5], 4
      %s28 = int_to_ptr.vmem [resolvable:$true] %s27
      %33 = dma.hbm_to_vmem [thread:$0]  %s1, 32, %s28, [#allocation6], 16, 16, 1
    $region9: #{tpu_custom_call.1} parent=1 // pred_fallthru
      _
    // Predicated region
    $region10: #{tpu_custom_call.1} parent=1 // pred_check
      _
    $region11: #{tpu_custom_call.1} parent=1 // pred_check_branch
      %35 = sbr.rel (0) target = $region13
    $region12: #{tpu_custom_call.1} parent=1 // pred_region
      %36 = dma.done [#allocation3], 32
    $region13: #{tpu_custom_call.1} parent=1 // pred_fallthru
      _
    // Predicated region
    $region14: #{tpu_custom_call.1} parent=1 // pred_check
      _
    $region15: #{tpu_custom_call.1} parent=1 // pred_check_branch
      %38 = sbr.rel (0) target = $region17
    $region16: #{tpu_custom_call.1} parent=1 // pred_region
      %39 = dma.done [#allocation6], 32
    $region17: #{tpu_custom_call.1} parent=1 // pred_fallthru
      _
    %v40 = vld [vmem:[#allocation2] sm:$0x1]
    %s41 = scalar_lea.vmem [#allocation2], 1
    %v42 = vld [vmem:[%s41] sm:$0x1]
    %v43 = vmax.f32 %v40, 0.0
    %v44 = vmul.f32 %v40, %v42
    %v45 = vsub.f32 %v43, %v44
    %v46 = vand.u32 2147483647, %v40
    %v47 = vsub.f32 0.0, %v46
    %v48 = vmul.f32 %v47, 1.442695
    %v49 = vpow.pop %v48
    %v50 = vadd.f32 %v49, 1.0
    %v51 = vlog2.pop %v50
    %v52 = vmul.f32 %v51, 0.6931472
    %v53 = vmul.f32 -0.5, %v49
    %v54 = vadd.f32 %v53, 1.0
    %v55 = vmul.f32 %v54, %v49
    %v56 = vand.u32 2147483647, %v49
    %vm57 = vcmp.lt.f32.partialorder %v56, 0.0004427343
    %v58 = vsel %vm57, %v55, %v52
    %v59 = vadd.f32 %v45, %v58
    %v60 = vlaneseq
    %v61 = vshrl.u32 %v60, 7
    %v62 = vlaneseq
    %v63 = vand.u32 %v62, 127
    %v64 = vmul.u32 %v61, 128
    %v65 = vadd.s32 %v64, %v63
    %vm66 = vcmp.lt.s32.totalorder %v65, 8
    %vm67 = vcmp.ge.f32.partialorder %v59, 0.35667494
    %vm68 = vmand %vm67, %vm66
    %v69 = vsel %vm68, 1, 0
    %v70 = vcvt.s32.f32 %v69
    %vm71 = vcmask 1040384
    %v72 = vsel %vm71, %v70, 0.0
    %73 = vadd.xlane.f32.xlu0 %v72
    %v74 = vpop.xlane.xlu0 %73
    %v75 = vrot.slane %v74, 4
    %v76 = vadd.f32 %v74, %v75
    %v77 = vrot.slane %v76, 2
    %v78 = vadd.f32 %v76, %v77
    %v79 = vrot.slane %v78, 1
    %v80 = vadd.f32 %v78, %v79
    %s81 = vtos %v80
    %v82 = vmul.f32 %v59, %v70
    %v83 = vsel %vm71, %v82, 0.0
    %84 = vadd.xlane.f32.xlu0 %v83
    %v85 = vpop.xlane.xlu0 %84
    %v86 = vrot.slane %v85, 4
    %v87 = vadd.f32 %v85, %v86
    %v88 = vrot.slane %v87, 2
    %v89 = vadd.f32 %v87, %v88
    %v90 = vrot.slane %v89, 1
    %v91 = vadd.f32 %v89, %v90
    %s92 = vtos %v91
    %v93 = vsel %vm66, %v59, -inf
    %v94 = vsel %vm71, %v93, -inf
    %95 = vmax.xlane.f32.xlu0 %v94
    %v96 = vpop.xlane.xlu0 %95
    %v97 = vrot.slane %v96, 4
    %v98 = vmax.f32 %v96, %v97
    %v99 = vrot.slane %v98, 2
    %v100 = vmax.f32 %v98, %v99
    %v101 = vrot.slane %v100, 1
    %v102 = vmax.f32 %v100, %v101
    %s103 = vtos %v102
    %p104 = scmp.eq.f32.partialorder %s81, 0.0
    %s105 = scalar_select %p104, 1.0, %s81
    %v106 = vstv %s105
    %v107 = vrcp.pop %v106
    %s108 = vtos %v107
    %s109 = smul.f32 %s92, %s108
    %s110 = scalar_select %p104, %s103, %s109
    %v111 = vld [vmem:[#allocation5] sm:$0x1]
    %v112 = vld [vmem:[#allocation5 + $0x1] sm:$0x1]
    %v113 = vxor.u32 %v111, 2147483648
    %v114 = vxor.u32 %v112, 2147483648
    %v115 = vmul.f32 %v113, 1.442695
    %v116 = vpow.pop %v115
    %v117 = vmul.f32 %v114, 1.442695
    %v118 = vpow.pop %v117
    %v119 = vadd.f32 %v116, 1.0
    %v120 = vadd.f32 %v118, 1.0
    %v121 = vrcp.pop %v119
    %v122 = vmul.f32 1.0, %v121
    %v123 = vrcp.pop %v120
    %v124 = vmul.f32 1.0, %v123
    %v125 = vsub.f32 %v122, %v124
    %v126 = vmul.f32 %v125, %v125
    %v127 = vsel %vm71, %v126, 0.0
    %128 = vadd.xlane.f32.xlu0 %v127
    %v129 = vpop.xlane.xlu0 %128
    %v130 = vrot.slane %v129, 4
    %v131 = vadd.f32 %v129, %v130
    %v132 = vrot.slane %v131, 2
    %v133 = vadd.f32 %v131, %v132
    %v134 = vrot.slane %v133, 1
    %v135 = vadd.f32 %v133, %v134
    %s136 = vtos %v135
    %s137 = smul.f32 %s136, 0.125
    %s138 = smul.f32 %s137, 0.5
    %s139 = sadd.f32 %s110, %s138
    %s140 = scalar_lea.smem [#allocation7], 0
    %141 = sst [smem:[%s140]] %s139
    %s142 = scalar_lea.smem [#allocation7], 1
    %143 = sst [smem:[%s142]] %s110
    %s144 = scalar_lea.smem [#allocation7], 2
    %145 = sst [smem:[%s144]] %s138
    // Predicated region
    $region18: #{tpu_custom_call.1} parent=1 // pred_check
      _
    $region19: #{tpu_custom_call.1} parent=1 // pred_check_branch
      %147 = sbr.rel (0) target = $region21
    $region20: #{tpu_custom_call.1} parent=1 // pred_region
      %s149 = ssub.s32 16, 16
      %150 = vsyncadd [#allocation4], %s149
      %153 = dma.smem_to_hbm [#allocation7], 16, %s2, [#allocation4]
    $region21: #{tpu_custom_call.1} parent=1 // pred_fallthru
      _
    // Predicated region
    $region22: #{tpu_custom_call.1} parent=1 // pred_check
      _
    $region23: #{tpu_custom_call.1} parent=1 // pred_check_branch
      %155 = sbr.rel (0) target = $region25
    $region24: #{tpu_custom_call.1} parent=1 // pred_region
      %156 = dma.done [#allocation4], 16
    $region25: #{tpu_custom_call.1} parent=1 // pred_fallthru
      _
    %157 = sfence
    %158 = vsyncpa [#allocation3], 1
    %159 = vsyncpa [#allocation6], 1
    %160 = vsyncpa [#allocation4], 1

</llo_original>
